<compile_context>
chip_gen: v7x
topology: tpu7x:2x2x1
jax: 0.10.0
libtpu: 0.0.40
codegen_flags: <defaults>
</compile_context>

<pallas_src>
import jax
import jax.numpy as jnp
from jax import lax
from jax.experimental import pallas as pl
from jax.experimental.pallas import tpu as pltpu


def _round_up(x, m):
    return ((x + m - 1) // m) * m


def _aspp_conv_kernel(x_ref, w_ref, b_ref, o_ref):
    """One grid step = one (image, tile_m-wide spatial tile).

    x_ref: (1, KKCp, TILE_M)  bf16 im2col'd activations (VMEM)
    w_ref: (Coutp, KKCp)      bf16 weights with BN scale folded in (VMEM)
    b_ref: (Coutp, 1)         f32 folded BN bias (VMEM)
    o_ref: (1, Coutp, TILE_M) f32 output tile (spatial on lanes -> unmasked stores)
    """
    acc = lax.dot_general(
        w_ref[...], x_ref[0],
        dimension_numbers=(((1,), (0,)), ((), ())),
        preferred_element_type=jnp.float32)          # (Coutp, TILE_M), f32 accumulate
    o_ref[0] = jnp.maximum(acc + b_ref[...], 0.0).astype(o_ref.dtype)


def aspp_conv_pallas(x_nchw, weight, bn_gamma, bn_beta, bn_mean, bn_var,
                     *, padding, dilation, eps=1e-5, tile_m=128):
    """x_nchw: [N, Cin, H, W] (PyTorch layout); returns [N, Cout, Ho, Wo]."""
    N, Cin, H, W = x_nchw.shape
    Cout, Cin_w, K, K2 = weight.shape
    assert Cin_w == Cin and K == K2

    Ho = H + 2 * padding - dilation * (K - 1)
    Wo = W + 2 * padding - dilation * (K - 1)
    M = Ho * Wo
    KKC = K * K * Cin

    # Pad the contraction dim to a bf16 sublane-pack multiple and Cout to a
    # sublane multiple so every VMEM tile is natively tiled (no masking).
    KKCp = _round_up(KKC, 16)
    Coutp = _round_up(Cout, 8)

    # ---- BN (inference) fold: scale into the weights, bias kept in f32 ----
    scale = bn_gamma.astype(jnp.float32) / jnp.sqrt(bn_var.astype(jnp.float32) + eps)
    bias = bn_beta.astype(jnp.float32) - bn_mean.astype(jnp.float32) * scale
    bias = bias.reshape(Cout, 1)
    w_folded = weight.astype(jnp.float32) * scale[:, None, None, None]
    # [Cout, Cin, K, K] -> [Cout, K*K*Cin]  (tap-major, Cin minor), bf16.
    w_flat = jnp.transpose(w_folded, (0, 2, 3, 1)).reshape(Cout, KKC)
    w_flat = w_flat.astype(jnp.bfloat16)
    w_flat = jnp.pad(w_flat, ((0, Coutp - Cout), (0, KKCp - KKC)))
    bias = jnp.pad(bias, ((0, Coutp - Cout), (0, 0)))

    # ---- im2col in bf16; NCHW preserved, so no layout transpose anywhere ----
    x_bf = x_nchw.astype(jnp.bfloat16)
    x_pad = jnp.pad(x_bf, ((0, 0), (0, 0),
                           (padding, padding), (padding, padding)))
    taps = []
    for kh in range(K):
        for kw in range(K):
            taps.append(x_pad[:, :,
                              kh * dilation:kh * dilation + Ho,
                              kw * dilation:kw * dilation + Wo])
    # Concatenating along the channel axis gives (kh, kw, cin) ordering with
    # cin innermost -- the same ordering as the weight flatten above.
    xcol = jnp.concatenate(taps, axis=1).reshape(N, KKC, M)
    xcol = jnp.pad(xcol, ((0, 0), (0, KKCp - KKC), (0, 0)))

    # Pad the spatial (lane) axis up to a multiple of tile_m so every store is
    # a full, unmasked, 128-lane-multiple write.
    n_m = pl.cdiv(M, tile_m)
    m_pad = n_m * tile_m
    if m_pad != M:
        xcol = jnp.pad(xcol, ((0, 0), (0, 0), (0, m_pad - M)))

    out = pl.pallas_call(
        _aspp_conv_kernel,
        out_shape=jax.ShapeDtypeStruct((N, Coutp, m_pad), jnp.float32),
        grid_spec=pltpu.PrefetchScalarGridSpec(
            num_scalar_prefetch=0,
            grid=(N, n_m),
            in_specs=[
                pl.BlockSpec((1, KKCp, tile_m), lambda n, m: (n, 0, m)),
                # Weights / bias are a few hundred bytes at these channel
                # counts; constant index_map means they are not re-fetched
                # between steps.
                pl.BlockSpec((Coutp, KKCp), lambda n, m: (0, 0)),
                pl.BlockSpec((Coutp, 1), lambda n, m: (0, 0)),
            ],
            out_specs=pl.BlockSpec((1, Coutp, tile_m), lambda n, m: (n, 0, m)),
        ),
        compiler_params=pltpu.CompilerParams(
            dimension_semantics=("parallel", "parallel"),
            vmem_limit_bytes=32 * 1024 * 1024),
    )(xcol, w_flat, bias)

    # (N, Coutp, m_pad) -> (N, Cout, Ho, Wo): slice off padding, then a
    # contiguous metadata reshape (free).
    return out[:, :Cout, :M].reshape(N, Cout, Ho, Wo)


def aspp_conv_reference(x_nchw, weight, bn_gamma, bn_beta, bn_mean, bn_var,
                        *, padding, dilation, eps=1e-5):
    """Pure-JAX reference mirroring the kernel's bf16-input / f32-accumulate math."""
    scale = bn_gamma / jnp.sqrt(bn_var + eps)
    bias = bn_beta - bn_mean * scale
    w_q = (weight.astype(jnp.float32) * scale[:, None, None, None]
           ).astype(jnp.bfloat16).astype(jnp.float32)
    x_q = x_nchw.astype(jnp.bfloat16).astype(jnp.float32)
    y = lax.conv_general_dilated(
        x_q, w_q, window_strides=(1, 1),
        padding=((padding, padding), (padding, padding)),
        rhs_dilation=(dilation, dilation),
        dimension_numbers=("NCHW", "OIHW", "NCHW"),
        precision=lax.Precision.HIGHEST)
    return jnp.maximum(y + bias.reshape(1, -1, 1, 1), 0.0)


if __name__ == "__main__":
    # ASPPConv(inplanes=4, outplanes=8, kernel_size=3, padding=2, dilation=2)
    N, Cin, H, W = 2, 4, 16, 16
    Cout, K, padding, dilation = 8, 3, 2, 2

    key = jax.random.PRNGKey(0)
    k_x, k_w, k_g, k_b, k_m, k_v = jax.random.split(key, 6)

    x = jax.random.normal(k_x, (N, Cin, H, W), dtype=jnp.float32)
    weight = jax.random.normal(k_w, (Cout, Cin, K, K), dtype=jnp.float32) * 0.1
    bn_gamma = 1.0 + 0.1 * jax.random.normal(k_g, (Cout,), dtype=jnp.float32)
    bn_beta = 0.1 * jax.random.normal(k_b, (Cout,), dtype=jnp.float32)
    bn_mean = 0.1 * jax.random.normal(k_m, (Cout,), dtype=jnp.float32)
    bn_var = jnp.abs(jax.random.normal(k_v, (Cout,), dtype=jnp.float32)) + 0.5

    out = aspp_conv_pallas(x, weight, bn_gamma, bn_beta, bn_mean, bn_var,
                           padding=padding, dilation=dilation)
    out = jax.block_until_ready(out)

    ref = aspp_conv_reference(x, weight, bn_gamma, bn_beta, bn_mean, bn_var,
                              padding=padding, dilation=dilation)
    ref = jax.block_until_ready(ref)

    assert out.shape == (N, Cout, H, W), out.shape
    assert jnp.allclose(out, ref, atol=2e-3, rtol=2e-3), \
        f"max err {jnp.max(jnp.abs(out - ref))}"
    print("KERNEL_OK")
</pallas_src>

<mosaic_0001>
module attributes {stable_mosaic.version = 11 : i64} {
  func.func @_aspp_conv_kernel(%arg0: i32, %arg1: i32, %arg2: memref<1x48x128xbf16, #tpu.memory_space<vmem>>, %arg3: memref<8x48xbf16, #tpu.memory_space<vmem>>, %arg4: memref<8x1xf32, #tpu.memory_space<vmem>>, %arg5: memref<1x8x128xf32, #tpu.memory_space<vmem>>) attributes {dimension_semantics = [#tpu.dimension_semantics<parallel>, #tpu.dimension_semantics<parallel>], iteration_bounds = array<i64: 2, 2>, scalar_prefetch = 0 : i64, scratch_operands = 0 : i64, tpu.core_type = #tpu.core_type<tc>, window_params = [{transform_indices = @transform_0, window_bounds = array<i64: 1, 48, 128>}, {pipeline_mode = #tpu.pipeline_mode<synchronous>, transform_indices = @transform_1, window_bounds = array<i64: 8, 48>}, {pipeline_mode = #tpu.pipeline_mode<synchronous>, transform_indices = @transform_2, window_bounds = array<i64: 8, 1>}, {transform_indices = @transform_3, window_bounds = array<i64: 1, 8, 128>}]} {
    %c0 = arith.constant 0 : index
    %c0_0 = arith.constant 0 : index
    %0 = vector.load %arg3[%c0, %c0_0] : memref<8x48xbf16, #tpu.memory_space<vmem>>, vector<8x48xbf16>
    %c0_1 = arith.constant 0 : index
    %c0_2 = arith.constant 0 : index
    %c0_3 = arith.constant 0 : index
    %1 = vector.load %arg2[%c0_1, %c0_2, %c0_3] : memref<1x48x128xbf16, #tpu.memory_space<vmem>>, vector<1x48x128xbf16>
    %2 = vector.shape_cast %1 : vector<1x48x128xbf16> to vector<48x128xbf16>
    %cst = arith.constant dense<0.000000e+00> : vector<8x128xf32>
    %3 = tpu.matmul %0, %2, %cst {dimension_numbers = #tpu.dot_dimension_numbers<[1], [0], [0], [1], [0, 0, 1, 1], [], []>} : vector<8x48xbf16>, vector<48x128xbf16>, vector<8x128xf32> -> vector<8x128xf32>
    %c0_4 = arith.constant 0 : index
    %c0_5 = arith.constant 0 : index
    %4 = vector.load %arg4[%c0_4, %c0_5] : memref<8x1xf32, #tpu.memory_space<vmem>>, vector<8x1xf32>
    %5 = vector.broadcast %4 : vector<8x1xf32> to vector<8x128xf32>
    %6 = arith.addf %3, %5 : vector<8x128xf32>
    %cst_6 = arith.constant 0.000000e+00 : f32
    %7 = vector.broadcast %cst_6 : f32 to vector<8x128xf32>
    %8 = arith.maximumf %6, %7 : vector<8x128xf32>
    %c0_7 = arith.constant 0 : index
    %c0_8 = arith.constant 0 : index
    %c0_9 = arith.constant 0 : index
    %9 = vector.load %arg5[%c0_7, %c0_8, %c0_9] : memref<1x8x128xf32, #tpu.memory_space<vmem>>, vector<1x8x128xf32>
    %10 = vector.shape_cast %9 : vector<1x8x128xf32> to vector<8x128xf32>
    %11 = vector.shape_cast %8 : vector<8x128xf32> to vector<1x8x128xf32>
    tpu.vector_store %arg5[%c0_7, %c0_8, %c0_9], %11 {strides = array<i32>} : memref<1x8x128xf32, #tpu.memory_space<vmem>>, vector<1x8x128xf32>,
    return
  }
  func.func @transform_0(%arg0: i32, %arg1: i32) -> (i32, i32, i32) {
    %c0_i32 = arith.constant 0 : i32
    %c0_i32_0 = arith.constant 0 : i32
    return %arg0, %c0_i32, %arg1 : i32, i32, i32
  }
  func.func @transform_1(%arg0: i32, %arg1: i32) -> (i32, i32) {
    %c0_i32 = arith.constant 0 : i32
    %c0_i32_0 = arith.constant 0 : i32
    %c0_i32_1 = arith.constant 0 : i32
    return %c0_i32, %c0_i32_0 : i32, i32
  }
  func.func @transform_2(%arg0: i32, %arg1: i32) -> (i32, i32) {
    %c0_i32 = arith.constant 0 : i32
    %c0_i32_0 = arith.constant 0 : i32
    %c0_i32_1 = arith.constant 0 : i32
    return %c0_i32, %c0_i32_0 : i32, i32
  }
  func.func @transform_3(%arg0: i32, %arg1: i32) -> (i32, i32, i32) {
    %c0_i32 = arith.constant 0 : i32
    %c0_i32_0 = arith.constant 0 : i32
    return %arg0, %c0_i32, %arg1 : i32, i32, i32
  }
}

</mosaic_0001>

<llo_original>
// kernel: tpu_custom_call.1
$region0: #{tpu_custom_call.1}
  #allocation0 [shape = 'u32[]', space=smem, size = 0x4, offset = 0x4, fixed_abs, tag = 'smem constant byte address 0x4 - core index']
  #allocation1 [shape = 'u32[144,128]{1,0:T(1,128)}', space=vmem, size = 0x12000, scoped, tag = 'internal scratch']
  %s0 = inlined_call_operand.hbm [shape: bf16[2,48,256], index: 0, kind: input, shape index: {}]
  %s1 = inlined_call_operand.vmem [shape: bf16[8,48], index: 1, kind: input, shape index: {}]
  %s2 = inlined_call_operand.vmem [shape: f32[8,1], index: 2, kind: input, shape index: {}]
  %s3 = inlined_call_operand.hbm [shape: f32[2,8,256], index: 3, kind: output, shape index: {}]
  %s4 = sld [smem:[#allocation0]]
  $region49: #{tpu_custom_call.1} parent=0
    _
  %s6 = ssub.s32 1, %s4
  %s7 = scalar_select 0, %s6, %s4
  $region1: #{tpu_custom_call.1} parent=0
    #allocation2 [shape = 'u8[24576]{0}', space=vmem, size = 0x6000, scoped, tag = 'input window, operand 0']
    #allocation3 [shape = 's32[2]{0}', space=sflag, size = 0x8, scoped, tag = 'scoped memory for tpu_custom_call.1']
    #allocation4 [shape = 's32[2]{0}', space=sflag, size = 0x8, scoped, tag = 'scoped memory for tpu_custom_call.1']
    #allocation5 [shape = 'u8[8192]{0}', space=vmem, size = 0x2000, scoped, tag = 'output window, operand 0']
    %8 = vsyncpa [#allocation3], 0
    %s9 = scalar_lea.sflag [#allocation3], 1
    %10 = vsyncpa %s9, 0
    %11 = vsyncpa [#allocation4], 0
    %s12 = scalar_lea.sflag [#allocation4], 1
    %13 = vsyncpa %s12, 0
    loop: start=0, step=1, limit=6
    $region2: #{tpu_custom_call.1} parent=1 // loop_pre_header
      _
    $region3: #{tpu_custom_call.1} parent=1 // loop_header
      %s15 = sphi 0, %s19
      %p16 = scmp.ge.s32.totalorder %s15, 6
      %s22 = sphi 0, %s34
      %s23 = sphi 0, %s30
      %s24 = sphi 0, %s22
      %s25 = sphi 0, %s23
      %s26 = sphi 0, %s24
      %s27 = sphi 0, %s25
      %s39 = sphi 0, %s41
      %s42 = sphi 0, %s39
      %s43 = sphi 0, %s42
      %s59 = sphi 0, %s43
      %s63 = sphi 0, %s63
      %s65 = sphi 0, %s63
      %s66 = sphi 0, %s65
      %s80 = sphi 0, %s66
      %s84 = sphi 0, %s84
      %s86 = sphi 0, %s84
      %s87 = sphi 0, %s86
      %s101 = sphi 0, %s87
      %s109 = sphi 0, %s111
      %s112 = sphi 0, %s109
      %s113 = sphi 0, %s112
      %s129 = sphi 0, %s113
    $region4: #{tpu_custom_call.1} parent=1 // loop_header_branch
      %18 = sbr.rel (%p16) target = $region8
    $region5: #{tpu_custom_call.1} parent=1 // loop_body
      %s20 = ssub.s32 %s15, 1
      %s21 = ssub.s32 %s15, 2
      %s28 = sadd.s32 1, %s23
      %p29 = scmp.ge.s32.totalorder %s28, 2
      %s30 = scalar_select %p29, 0, %s28
      %s31 = sadd.s32 1, %s22
      %s32 = scalar_select %p29, %s31, %s22
      %p33 = scmp.ge.s32.totalorder %s32, 2
      %s34 = scalar_select %p33, 0, %s32
      %s35 = ssub.s32 %s22, %s34
      %s36 = ssub.s32 %s23, %s30
      %s37 = sor.u32 %s35, %s36
      %p38 = scmp.eq.s32.totalorder %s37, 0
      %s40 = sadd.s32 %s39, 1
      %s41 = scalar_select %p38, %s39, %s40
      %p44 = pneg %p38
      %p45 = scmp.eq.s32.totalorder %s15, 3
      %p46 = por %p44, %p45
      %p47 = scmp.ne.s32.totalorder %s39, %s42
      %p48 = scmp.eq.s32.totalorder %s15, 0
      %p49 = por %p47, %p48
      %p50 = scmp.ne.s32.totalorder %s39, %s42
      %p51 = scmp.eq.s32.totalorder %s20, 3
      %p52 = por %p50, %p51
      %p53 = scmp.ne.s32.totalorder %s42, %s43
      %p54 = scmp.eq.s32.totalorder %s20, 0
      %p55 = por %p53, %p54
      %p56 = scmp.ne.s32.totalorder %s42, %s43
      %p57 = scmp.eq.s32.totalorder %s21, 3
      %p58 = por %p56, %p57
      %p60 = scmp.ne.s32.totalorder %s43, %s59
      %p61 = scmp.eq.s32.totalorder %s21, 0
      %p62 = por %p60, %p61
      %s64 = sadd.s32 %s63, 1
      %p67 = scmp.eq.s32.totalorder %s15, 3
      %p68 = scmp.ne.s32.totalorder %s63, %s65
      %p69 = scmp.eq.s32.totalorder %s15, 0
      %p70 = por %p68, %p69
      %p71 = scmp.ne.s32.totalorder %s63, %s65
      %p72 = scmp.eq.s32.totalorder %s20, 3
      %p73 = por %p71, %p72
      %p74 = scmp.ne.s32.totalorder %s65, %s66
      %p75 = scmp.eq.s32.totalorder %s20, 0
      %p76 = por %p74, %p75
      %p77 = scmp.ne.s32.totalorder %s65, %s66
      %p78 = scmp.eq.s32.totalorder %s21, 3
      %p79 = por %p77, %p78
      %p81 = scmp.ne.s32.totalorder %s66, %s80
      %p82 = scmp.eq.s32.totalorder %s21, 0
      %p83 = por %p81, %p82
      %s85 = sadd.s32 %s84, 1
      %p88 = scmp.eq.s32.totalorder %s15, 3
      %p89 = scmp.ne.s32.totalorder %s84, %s86
      %p90 = scmp.eq.s32.totalorder %s15, 0
      %p91 = por %p89, %p90
      %p92 = scmp.ne.s32.totalorder %s84, %s86
      %p93 = scmp.eq.s32.totalorder %s20, 3
      %p94 = por %p92, %p93
      %p95 = scmp.ne.s32.totalorder %s86, %s87
      %p96 = scmp.eq.s32.totalorder %s20, 0
      %p97 = por %p95, %p96
      %p98 = scmp.ne.s32.totalorder %s86, %s87
      %p99 = scmp.eq.s32.totalorder %s21, 3
      %p100 = por %p98, %p99
      %p102 = scmp.ne.s32.totalorder %s87, %s101
      %p103 = scmp.eq.s32.totalorder %s21, 0
      %p104 = por %p102, %p103
      %s105 = ssub.s32 %s22, %s34
      %s106 = ssub.s32 %s23, %s30
      %s107 = sor.u32 %s105, %s106
      %p108 = scmp.eq.s32.totalorder %s107, 0
      %s110 = sadd.s32 %s109, 1
      %s111 = scalar_select %p108, %s109, %s110
      %p114 = pneg %p108
      %p115 = scmp.eq.s32.totalorder %s15, 3
      %p116 = por %p114, %p115
      %p117 = scmp.ne.s32.totalorder %s109, %s112
      %p118 = scmp.eq.s32.totalorder %s15, 0
      %p119 = por %p117, %p118
      %p120 = scmp.ne.s32.totalorder %s109, %s112
      %p121 = scmp.eq.s32.totalorder %s20, 3
      %p122 = por %p120, %p121
      %p123 = scmp.ne.s32.totalorder %s112, %s113
      %p124 = scmp.eq.s32.totalorder %s20, 0
      %p125 = por %p123, %p124
      %p126 = scmp.ne.s32.totalorder %s112, %s113
      %p127 = scmp.eq.s32.totalorder %s21, 3
      %p128 = por %p126, %p127
      %p130 = scmp.ne.s32.totalorder %s113, %s129
      %p131 = scmp.eq.s32.totalorder %s21, 0
      %p132 = por %p130, %p131
      %p133 = scmp.le.s32.totalorder 1, %s15
      %p134 = scmp.lt.s32.totalorder %s15, 5
      %p135 = pnand %p133, %p134
      %p136 = pneg %p135
      // Predicated region
      $region9: #{tpu_custom_call.1} parent=5 // pred_check
        _
      $region10: #{tpu_custom_call.1} parent=5 // pred_check_branch
        %138 = sbr.rel (%p135) target = $region12
      $region11: #{tpu_custom_call.1} parent=5 // pred_region
        %s139 = ssub.s32 %s15, 1
        // Predicated region
        $region13: #{tpu_custom_call.1} parent=11 // pred_check
          %p140 = pneg %p76
        $region14: #{tpu_custom_call.1} parent=11 // pred_check_branch
          %142 = sbr.rel (%p140) target = $region16
        $region15: #{tpu_custom_call.1} parent=11 // pred_region
          _
        $region16: #{tpu_custom_call.1} parent=11 // pred_fallthru
          _
        // Predicated region
        $region17: #{tpu_custom_call.1} parent=11 // pred_check
          %p143 = pneg %p97
        $region18: #{tpu_custom_call.1} parent=11 // pred_check_branch
          %145 = sbr.rel (%p143) target = $region20
        $region19: #{tpu_custom_call.1} parent=11 // pred_region
          _
        $region20: #{tpu_custom_call.1} parent=11 // pred_fallthru
          _
      $region12: #{tpu_custom_call.1} parent=5 // pred_fallthru
        _
      %p146 = scmp.lt.s32.totalorder %s15, 4
      // Predicated region
      $region21: #{tpu_custom_call.1} parent=5 // pred_check
        %p147 = pneg %p146
      $region22: #{tpu_custom_call.1} parent=5 // pred_check_branch
        %149 = sbr.rel (%p147) target = $region24
      $region23: #{tpu_custom_call.1} parent=5 // pred_region
        // Predicated region
        $region25: #{tpu_custom_call.1} parent=23 // pred_check
          %p150 = pneg %p49
        $region26: #{tpu_custom_call.1} parent=23 // pred_check_branch
          %152 = sbr.rel (%p150) target = $region28
        $region27: #{tpu_custom_call.1} parent=23 // pred_region
          %s153 = sand.u32 %s39, 1
          %s154 = scalar_lea.sflag [#allocation3], %s153
          %s155 = sand.u32 %s39, 1
          %s156 = smul.addr %s155, 24
          %s157 = scalar_lea.vmem [#allocation2], %s156
          %s159 = ssub.s32 384, 384
          %160 = vsyncadd %s154, %s159
          %s161 = smul.addr %s22, 12
          %s162 = sadd.s32 %s23, %s161
          %s163 = smul.addr %s162, 64
          %s164 = scalar_lea.hbm %s0, %s163
          %s165 = sshll.u32 %s157, 4
          %s166 = int_to_ptr.vmem [resolvable:$true] %s165
          %171 = dma.hbm_to_vmem [thread:$0]  %s164, 384, %s166, %s154, 128, 64, 4
        $region28: #{tpu_custom_call.1} parent=23 // pred_fallthru
          _
      $region24: #{tpu_custom_call.1} parent=5 // pred_fallthru
        _
      %p172 = scmp.le.s32.totalorder 1, %s15
      %p173 = scmp.lt.s32.totalorder %s15, 5
      %p174 = pnand %p172, %p173
      %p175 = pneg %p174
      // Predicated region
      $region29: #{tpu_custom_call.1} parent=5 // pred_check
        _
      $region30: #{tpu_custom_call.1} parent=5 // pred_check_branch
        %177 = sbr.rel (%p174) target = $region32
      $region31: #{tpu_custom_call.1} parent=5 // pred_region
        %s178 = ssub.s32 %s15, 1
        %s179 = sand.u32 %s42, 1
        %s180 = scalar_lea.sflag [#allocation3], %s179
        %s181 = sand.u32 %s42, 1
        %s182 = smul.addr %s181, 24
        %s183 = scalar_lea.vmem [#allocation2], %s182
        // Predicated region
        $region33: #{tpu_custom_call.1} parent=31 // pred_check
          %p184 = pneg %p55
        $region34: #{tpu_custom_call.1} parent=31 // pred_check_branch
          %186 = sbr.rel (%p184) target = $region36
        $region35: #{tpu_custom_call.1} parent=31 // pred_region
          %187 = dma.done %s180, 384
        $region36: #{tpu_custom_call.1} parent=31 // pred_fallthru
          _
        %s188 = sand.u32 %s42, 1
        %s189 = scalar_lea.sflag [#allocation3], %s188
        %s190 = sand.u32 %s42, 1
        %s191 = smul.addr %s190, 24
        %s192 = scalar_lea.vmem [#allocation2], %s191
        %p193 = pneg %p55
        %p194 = pneg %p52
        %p195 = pneg %p76
        %p196 = pneg %p73
        %p197 = pneg %p97
        %p198 = pneg %p94
        %p199 = pneg %p125
        %p200 = pneg %p122
        %s201 = sand.u32 %s112, 1
        %s202 = scalar_lea.sflag [#allocation4], %s201
        %s203 = sand.u32 %s112, 1
        %s204 = smul.addr %s203, 8
        %s205 = scalar_lea.vmem [#allocation5], %s204
        %v207 = vld [vmem:[%s1] sm:$0xf]
        %v208 = vld [vmem:[%s183] sm:$0xf]
        %v209 = vld [vmem:[%s183 + $0x4] sm:$0xf]
        %v210 = vld [vmem:[%s183 + $0x8] sm:$0xf]
        %v211 = vld [vmem:[%s183 + $0xc] sm:$0xf]
        %v212 = vld [vmem:[%s183 + $0x10] sm:$0xf]
        %v213 = vld [vmem:[%s183 + $0x14] sm:$0xf]
        %v214 = vld [vmem:[%s2] sm:$0xff]
        %216 = vset.pattern.permute.xlu0 0
        %217 = vperm.xlu0 %216, %v214
        %v218 = vpop.permute.xlu0 %217
        %v226 = vunpack.c.l.b16 %v208
        %v227 = vunpack.c.l.b16 %v209
        %v228 = vunpack.c.l.b16 %v210
        %v229 = vunpack.c.l.b16 %v211
        %v230 = vunpack.c.l.b16 %v212
        %v231 = vunpack.c.l.b16 %v213
        %v232 = vpack.c.b16 %v227, %v226
        %v233 = vpack.c.b16 %v229, %v228
        %v234 = vpack.c.b16 %v231, %v230
        %vm238 = vcmask 392192
        %v240 = vsel %vm238, %v207, 0
        %242 = vmatprep.subr.bf16.mxu0 0
        %243 = vmatpush1.bf16.msra.mxu0 %v232
        %244 = vmatprep.subr.bf16.mxu0 0
        %245 = vmatpush1.bf16.msra.mxu0 %v233
        %246 = vmatprep.subr.bf16.mxu0 0
        %247 = vmatpush1.bf16.msra.mxu0 %v234
        %248 = vmatprep.subr.bf16.mxu0 0
        %249 = vmatpush1.bf16.msra.mxu0 0
        %250 = vmatprep.subr.bf16.mxu0 0
        %251 = vmatpush1.bf16.msra.mxu0 0
        %252 = vmatprep.subr.bf16.mxu0 0
        %253 = vmatpush1.bf16.msra.mxu0 0
        %254 = vmatprep.subr.bf16.mxu0 0
        %255 = vmatpush1.bf16.msra.mxu0 0
        %256 = vmatprep.subr.bf16.mxu0 0
        %257 = vmatpush1.bf16.msra.mxu0 0
        %258 = vmatprep.subr.bf16.mxu0 0
        %259 = vmatpush1.bf16.msra.mxu0 0
        %260 = vmatprep.subr.bf16.mxu0 0
        %261 = vmatpush1.bf16.msra.mxu0 0
        %262 = vmatprep.subr.bf16.mxu0 0
        %263 = vmatpush1.bf16.msra.mxu0 0
        %264 = vmatprep.subr.bf16.mxu0 0
        %265 = vmatpush1.bf16.msra.mxu0 0
        %266 = vmatprep.subr.bf16.mxu0 0
        %267 = vmatpush1.bf16.msra.mxu0 0
        %268 = vmatprep.subr.bf16.mxu0 0
        %269 = vmatpush1.bf16.msra.mxu0 0
        %270 = vmatprep.subr.bf16.mxu0 0
        %271 = vmatpush1.bf16.msra.mxu0 0
        %272 = vmatprep.subr.bf16.mxu0 0
        %273 = vmatpush1.bf16.msra.mxu0 0
        %274 = vmatprep.mubr.bf16.mxu0 0
        %275 = vmatmul.mubr.bf16.gmra.mrb[0].mxu0 %v240
        %v276 = vpop.f32.mrb[0].mxu0
        %v277 = vadd.f32 %v218, %v276
        %v278 = vpop.f32.mrb[0].mxu0
        %v279 = vpop.f32.mrb[0].mxu0
        %v280 = vpop.f32.mrb[0].mxu0
        %281 = vdwg.mxu0
        %v282 = vmax.f32 %v277, 0.0
        %283 = vst [vmem:[%s205] sm:$0xff] %v282
        %s284 = sand.u32 %s112, 1
        %s285 = scalar_lea.sflag [#allocation4], %s284
        %s286 = sand.u32 %s112, 1
        %s287 = smul.addr %s286, 8
        %s288 = scalar_lea.vmem [#allocation5], %s287
        // Predicated region
        $region37: #{tpu_custom_call.1} parent=31 // pred_check
          %p289 = pneg %p122
        $region38: #{tpu_custom_call.1} parent=31 // pred_check_branch
          %291 = sbr.rel (%p289) target = $region40
        $region39: #{tpu_custom_call.1} parent=31 // pred_region
          %s293 = ssub.s32 128, 128
          %294 = vsyncadd %s285, %s293
          %s295 = smul.addr %s24, 2
          %s296 = sadd.s32 %s25, %s295
          %s297 = smul.addr %s296, 128
          %s298 = scalar_lea.hbm %s3, %s297
          %s300 = sshll.u32 %s288, 4
          %s301 = int_to_ptr.vmem [resolvable:$true] %s300
          %303 = dma.vmem_to_hbm [thread:$0]  %s301, 128, %s298, %s285
        $region40: #{tpu_custom_call.1} parent=31 // pred_fallthru
          _
      $region32: #{tpu_custom_call.1} parent=5 // pred_fallthru
        _
      %p304 = scmp.le.s32.totalorder 2, %s15
      // Predicated region
      $region41: #{tpu_custom_call.1} parent=5 // pred_check
        %p305 = pneg %p304
      $region42: #{tpu_custom_call.1} parent=5 // pred_check_branch
        %307 = sbr.rel (%p305) target = $region44
      $region43: #{tpu_custom_call.1} parent=5 // pred_region
        %s308 = ssub.s32 %s15, 2
        // Predicated region
        $region45: #{tpu_custom_call.1} parent=43 // pred_check
          %p309 = pneg %p128
        $region46: #{tpu_custom_call.1} parent=43 // pred_check_branch
          %311 = sbr.rel (%p309) target = $region48
        $region47: #{tpu_custom_call.1} parent=43 // pred_region
          %s312 = sand.u32 %s113, 1
          %s313 = scalar_lea.sflag [#allocation4], %s312
          %s314 = sand.u32 %s113, 1
          %s315 = smul.addr %s314, 8
          %s316 = scalar_lea.vmem [#allocation5], %s315
          %317 = dma.done %s313, 128
        $region48: #{tpu_custom_call.1} parent=43 // pred_fallthru
          _
      $region44: #{tpu_custom_call.1} parent=5 // pred_fallthru
        _
    $region6: #{tpu_custom_call.1} parent=1 // loop_footer
      %s19 = sadd.s32 1, %s15
    $region7: #{tpu_custom_call.1} parent=1 // loop_footer_branch
      %14 = sbr.rel target = $region3
    $region8: #{tpu_custom_call.1} parent=1 // loop_exit
      _
    %318 = vsyncpa [#allocation3], 1
    %s319 = scalar_lea.sflag [#allocation3], 1
    %320 = vsyncpa %s319, 1
    %321 = vsyncpa [#allocation4], 1
    %s322 = scalar_lea.sflag [#allocation4], 1
    %323 = vsyncpa %s322, 1

</llo_original>
